<compile_context>
chip_gen: v7x
topology: tpu7x:2x2x1
jax: 0.10.0
libtpu: 0.0.40
codegen_flags: <defaults>
</compile_context>

<pallas_src>
import functools

import jax
import jax.numpy as jnp
from jax.experimental import pallas as pl
from jax.experimental.pallas import tpu as pltpu

Z_DIM = 100           # generator latent dim (z_dim in the PyTorch module)
Z_PAD = 128           # zero-padded contraction dim (1 * 128 lanes)
H1 = 128
H2 = 256
OUT_DIM = 28 * 28     # 784 (== full last dim of the kernel output)


def _round_up(x, m):
    return ((x + m - 1) // m) * m


def _supports_bf16_eup():
    """bf16 transcendentals exist on v6e and newer; not on v5e/v5p/v4/v3/v2."""
    try:
        kind = jax.devices()[0].device_kind.lower()
    except Exception:
        return False
    return not any(t in kind for t in ("v2", "v3", "v4", "v5"))


def generator_kernel(z_ref, w1_ref, b1_ref, w2_ref, b2_ref, w3_ref, b3_ref,
                     o_ref, *, tanh_bf16):
    # One batch tile per grid step.  Weights/biases are VMEM-resident
    # (constant index maps); only the latent tile and output tile stream.
    z = z_ref[...]                                       # (TB, 128) bf16

    h1 = jnp.dot(z, w1_ref[...], preferred_element_type=jnp.float32)
    h1 = jnp.maximum(h1 + b1_ref[...], 0.0)              # ReLU in f32

    h2 = jnp.dot(h1.astype(jnp.bfloat16), w2_ref[...],
                 preferred_element_type=jnp.float32)
    h2 = jnp.maximum(h2 + b2_ref[...], 0.0)              # ReLU in f32

    z3 = jnp.dot(h2.astype(jnp.bfloat16), w3_ref[...],
                 preferred_element_type=jnp.float32)
    z3 = z3 + b3_ref[...]
    if tanh_bf16:
        y = jnp.tanh(z3.astype(jnp.bfloat16))   # bf16 EUP (v6e/v7x)
    else:
        y = jnp.tanh(z3)                        # f32 EUP (v5e and older)
    o_ref[...] = y.astype(o_ref.dtype)


def init_params(key):
    """f32 params with nn.Linear-style init, stored as (in, out) = W^T."""
    ks = jax.random.split(key, 6)

    def lin(kw, kb, fan_in, fan_out):
        bound = 1.0 / jnp.sqrt(fan_in)
        w = jax.random.uniform(kw, (fan_in, fan_out), jnp.float32, -bound, bound)
        b = jax.random.uniform(kb, (1, fan_out), jnp.float32, -bound, bound)
        return w, b

    w1, b1 = lin(ks[0], ks[1], Z_DIM, H1)
    w2, b2 = lin(ks[2], ks[3], H1, H2)
    w3, b3 = lin(ks[4], ks[5], H2, OUT_DIM)
    return (w1, b1, w2, b2, w3, b3)


def prepare_params(params_f32):
    """Lane-align the contraction dim of layer 1; cast matmul operands to bf16."""
    w1, b1, w2, b2, w3, b3 = params_f32
    # Pad latent contraction dim 100 -> 128 with zero rows (inert with padded z).
    w1p = jnp.zeros((Z_PAD, H1), jnp.bfloat16).at[:Z_DIM, :].set(
        w1.astype(jnp.bfloat16))
    w2p = w2.astype(jnp.bfloat16)
    w3p = w3.astype(jnp.bfloat16)        # (256, 784) — no output-lane padding
    return (w1p, b1, w2p, b2, w3p, b3)


def generator_forward(z, kernel_params, *, tb=512, tanh_bf16=None):
    """z: (B, 100) f32 latent. Returns (B, 1, 28, 28) f32 like the module."""
    w1, b1, w2, b2, w3, b3 = kernel_params
    B = z.shape[0]
    if tanh_bf16 is None:
        tanh_bf16 = _supports_bf16_eup()

    # Batch tile: multiple of 16 sublanes (bf16 packing), capped at `tb`, and
    # no larger than half the (rounded) batch so the grid has >= 2 steps and
    # both v7x TensorCores get work.  B_pad == B whenever B is a tile multiple.
    half = _round_up(max(1, -(-B // 2)), 16)
    TB = max(16, min(tb, half))
    B_pad = _round_up(B, TB)
    grid = (B_pad // TB,)

    # Single fused pad+cast of the latent.  Rows B..B_pad and lanes 100..128
    # are zero; the padded lanes meet zero rows of w1, so they are inert.
    z_p = jnp.pad(z.astype(jnp.bfloat16),
                  ((0, B_pad - B), (0, Z_PAD - Z_DIM)))

    const = lambda shape: pl.BlockSpec(shape, lambda i: (0, 0))

    flops = 2 * B_pad * (Z_PAD * H1 + H1 * H2 + H2 * OUT_DIM)
    bytes_accessed = (int(z_p.size) * 2 + B_pad * OUT_DIM * 4
                      + sum(int(a.size) * a.dtype.itemsize
                            for a in (w1, b1, w2, b2, w3, b3)))
    cost = pl.CostEstimate(flops=flops,
                           transcendentals=B_pad * OUT_DIM,
                           bytes_accessed=bytes_accessed)

    out = pl.pallas_call(
        functools.partial(generator_kernel, tanh_bf16=tanh_bf16),
        out_shape=jax.ShapeDtypeStruct((B_pad, OUT_DIM), jnp.float32),
        grid=grid,
        in_specs=[
            pl.BlockSpec((TB, Z_PAD), lambda i: (i, 0)),   # streamed latent
            const((Z_PAD, H1)), const((1, H1)),            # resident layer 1
            const((H1, H2)), const((1, H2)),               # resident layer 2
            const((H2, OUT_DIM)), const((1, OUT_DIM)),     # resident layer 3
        ],
        out_specs=pl.BlockSpec((TB, OUT_DIM), lambda i: (i, 0)),
        compiler_params=pltpu.CompilerParams(
            dimension_semantics=("parallel",),
            vmem_limit_bytes=32 * 1024 * 1024,
        ),
        cost_estimate=cost,
    )(z_p, w1, b1, w2, b2, w3, b3)

    if B_pad != B:
        out = out[:B]                   # batch-only slice (no lane slicing)
    return out.reshape(B, 1, 28, 28)    # 784 == 28*28 -> free bitcast


def reference_forward(z, params_f32):
    w1, b1, w2, b2, w3, b3 = params_f32
    h = jnp.maximum(z @ w1 + b1, 0.0)
    h = jnp.maximum(h @ w2 + b2, 0.0)
    return jnp.tanh(h @ w3 + b3).reshape(-1, 1, 28, 28)


if __name__ == "__main__":
    key = jax.random.PRNGKey(0)
    k_z, k_p = jax.random.split(key)

    B = 4
    z = jax.random.normal(k_z, (B, Z_DIM), jnp.float32)

    params_f32 = init_params(k_p)
    kernel_params = prepare_params(params_f32)

    out = generator_forward(z, kernel_params)
    out = jax.block_until_ready(out)

    ref = reference_forward(z, params_f32)
    assert out.shape == (B, 1, 28, 28), out.shape
    # bf16 matmul operands (f32 accumulation) + optional bf16 tanh -> small
    # deviation from the f32 reference.
    assert jnp.allclose(out, ref, atol=2e-2, rtol=2e-2), (
        float(jnp.max(jnp.abs(out - ref))))

    print("KERNEL_OK")
</pallas_src>

<mosaic_0001>
module attributes {stable_mosaic.version = 11 : i64} {
  func.func @generator_kernel(%arg0: i32, %arg1: memref<16x128xbf16, #tpu.memory_space<vmem>>, %arg2: memref<128x128xbf16, #tpu.memory_space<vmem>>, %arg3: memref<1x128xf32, #tpu.memory_space<vmem>>, %arg4: memref<128x256xbf16, #tpu.memory_space<vmem>>, %arg5: memref<1x256xf32, #tpu.memory_space<vmem>>, %arg6: memref<256x784xbf16, #tpu.memory_space<vmem>>, %arg7: memref<1x784xf32, #tpu.memory_space<vmem>>, %arg8: memref<16x784xf32, #tpu.memory_space<vmem>>) attributes {dimension_semantics = [#tpu.dimension_semantics<parallel>], iteration_bounds = array<i64: 1>, scalar_prefetch = 0 : i64, scratch_operands = 0 : i64, tpu.core_type = #tpu.core_type<tc>, window_params = [{transform_indices = @transform_0, window_bounds = array<i64: 16, 128>}, {pipeline_mode = #tpu.pipeline_mode<synchronous>, transform_indices = @transform_1, window_bounds = array<i64: 128, 128>}, {pipeline_mode = #tpu.pipeline_mode<synchronous>, transform_indices = @transform_2, window_bounds = array<i64: 1, 128>}, {pipeline_mode = #tpu.pipeline_mode<synchronous>, transform_indices = @transform_3, window_bounds = array<i64: 128, 256>}, {pipeline_mode = #tpu.pipeline_mode<synchronous>, transform_indices = @transform_4, window_bounds = array<i64: 1, 256>}, {pipeline_mode = #tpu.pipeline_mode<synchronous>, transform_indices = @transform_5, window_bounds = array<i64: 256, 784>}, {pipeline_mode = #tpu.pipeline_mode<synchronous>, transform_indices = @transform_6, window_bounds = array<i64: 1, 784>}, {transform_indices = @transform_7, window_bounds = array<i64: 16, 784>}]} {
    %c0 = arith.constant 0 : index
    %c0_0 = arith.constant 0 : index
    %0 = vector.load %arg1[%c0, %c0_0] : memref<16x128xbf16, #tpu.memory_space<vmem>>, vector<16x128xbf16>
    %c0_1 = arith.constant 0 : index
    %c0_2 = arith.constant 0 : index
    %1 = vector.load %arg2[%c0_1, %c0_2] : memref<128x128xbf16, #tpu.memory_space<vmem>>, vector<128x128xbf16>
    %cst = arith.constant dense<0.000000e+00> : vector<16x128xf32>
    %2 = tpu.matmul %0, %1, %cst {dimension_numbers = #tpu.dot_dimension_numbers<[1], [0], [0], [1], [0, 0, 1, 1], [], []>} : vector<16x128xbf16>, vector<128x128xbf16>, vector<16x128xf32> -> vector<16x128xf32>
    %c0_3 = arith.constant 0 : index
    %c0_4 = arith.constant 0 : index
    %3 = vector.load %arg3[%c0_3, %c0_4] : memref<1x128xf32, #tpu.memory_space<vmem>>, vector<1x128xf32>
    %4 = vector.broadcast %3 : vector<1x128xf32> to vector<16x128xf32>
    %5 = arith.addf %2, %4 : vector<16x128xf32>
    %cst_5 = arith.constant 0.000000e+00 : f32
    %6 = vector.broadcast %cst_5 : f32 to vector<16x128xf32>
    %7 = arith.maximumf %5, %6 : vector<16x128xf32>
    %8 = arith.truncf %7 : vector<16x128xf32> to vector<16x128xbf16>
    %c0_6 = arith.constant 0 : index
    %c0_7 = arith.constant 0 : index
    %9 = vector.load %arg4[%c0_6, %c0_7] : memref<128x256xbf16, #tpu.memory_space<vmem>>, vector<128x256xbf16>
    %cst_8 = arith.constant dense<0.000000e+00> : vector<16x256xf32>
    %10 = tpu.matmul %8, %9, %cst_8 {dimension_numbers = #tpu.dot_dimension_numbers<[1], [0], [0], [1], [0, 0, 1, 1], [], []>} : vector<16x128xbf16>, vector<128x256xbf16>, vector<16x256xf32> -> vector<16x256xf32>
    %c0_9 = arith.constant 0 : index
    %c0_10 = arith.constant 0 : index
    %11 = vector.load %arg5[%c0_9, %c0_10] : memref<1x256xf32, #tpu.memory_space<vmem>>, vector<1x256xf32>
    %12 = vector.broadcast %11 : vector<1x256xf32> to vector<16x256xf32>
    %13 = arith.addf %10, %12 : vector<16x256xf32>
    %cst_11 = arith.constant 0.000000e+00 : f32
    %14 = vector.broadcast %cst_11 : f32 to vector<16x256xf32>
    %15 = arith.maximumf %13, %14 : vector<16x256xf32>
    %16 = arith.truncf %15 : vector<16x256xf32> to vector<16x256xbf16>
    %c0_12 = arith.constant 0 : index
    %c0_13 = arith.constant 0 : index
    %17 = vector.load %arg6[%c0_12, %c0_13] : memref<256x784xbf16, #tpu.memory_space<vmem>>, vector<256x784xbf16>
    %cst_14 = arith.constant dense<0.000000e+00> : vector<16x784xf32>
    %18 = tpu.matmul %16, %17, %cst_14 {dimension_numbers = #tpu.dot_dimension_numbers<[1], [0], [0], [1], [0, 0, 1, 1], [], []>} : vector<16x256xbf16>, vector<256x784xbf16>, vector<16x784xf32> -> vector<16x784xf32>
    %c0_15 = arith.constant 0 : index
    %c0_16 = arith.constant 0 : index
    %19 = vector.load %arg7[%c0_15, %c0_16] : memref<1x784xf32, #tpu.memory_space<vmem>>, vector<1x784xf32>
    %20 = vector.broadcast %19 : vector<1x784xf32> to vector<16x784xf32>
    %21 = arith.addf %18, %20 : vector<16x784xf32>
    %22 = arith.truncf %21 : vector<16x784xf32> to vector<16x784xbf16>
    %23 = math.tanh %22 : vector<16x784xbf16>
    %24 = arith.extf %23 : vector<16x784xbf16> to vector<16x784xf32>
    %c0_17 = arith.constant 0 : index
    %c0_18 = arith.constant 0 : index
    %25 = vector.load %arg8[%c0_17, %c0_18] : memref<16x784xf32, #tpu.memory_space<vmem>>, vector<16x784xf32>
    tpu.vector_store %arg8[%c0_17, %c0_18], %24 {strides = array<i32>} : memref<16x784xf32, #tpu.memory_space<vmem>>, vector<16x784xf32>,
    return
  }
  func.func @transform_0(%arg0: i32) -> (i32, i32) {
    %c0_i32 = arith.constant 0 : i32
    %c0_i32_0 = arith.constant 0 : i32
    return %arg0, %c0_i32 : i32, i32
  }
  func.func @transform_1(%arg0: i32) -> (i32, i32) {
    %c0_i32 = arith.constant 0 : i32
    %c0_i32_0 = arith.constant 0 : i32
    %c0_i32_1 = arith.constant 0 : i32
    return %c0_i32, %c0_i32_0 : i32, i32
  }
  func.func @transform_2(%arg0: i32) -> (i32, i32) {
    %c0_i32 = arith.constant 0 : i32
    %c0_i32_0 = arith.constant 0 : i32
    %c0_i32_1 = arith.constant 0 : i32
    return %c0_i32, %c0_i32_0 : i32, i32
  }
  func.func @transform_3(%arg0: i32) -> (i32, i32) {
    %c0_i32 = arith.constant 0 : i32
    %c0_i32_0 = arith.constant 0 : i32
    %c0_i32_1 = arith.constant 0 : i32
    return %c0_i32, %c0_i32_0 : i32, i32
  }
  func.func @transform_4(%arg0: i32) -> (i32, i32) {
    %c0_i32 = arith.constant 0 : i32
    %c0_i32_0 = arith.constant 0 : i32
    %c0_i32_1 = arith.constant 0 : i32
    return %c0_i32, %c0_i32_0 : i32, i32
  }
  func.func @transform_5(%arg0: i32) -> (i32, i32) {
    %c0_i32 = arith.constant 0 : i32
    %c0_i32_0 = arith.constant 0 : i32
    %c0_i32_1 = arith.constant 0 : i32
    return %c0_i32, %c0_i32_0 : i32, i32
  }
  func.func @transform_6(%arg0: i32) -> (i32, i32) {
    %c0_i32 = arith.constant 0 : i32
    %c0_i32_0 = arith.constant 0 : i32
    %c0_i32_1 = arith.constant 0 : i32
    return %c0_i32, %c0_i32_0 : i32, i32
  }
  func.func @transform_7(%arg0: i32) -> (i32, i32) {
    %c0_i32 = arith.constant 0 : i32
    %c0_i32_0 = arith.constant 0 : i32
    return %arg0, %c0_i32 : i32, i32
  }
}

</mosaic_0001>

<llo_original>
// kernel: tpu_custom_call.1
$region0: #{tpu_custom_call.1}
  #allocation0 [shape = 'u32[]', space=smem, size = 0x4, offset = 0x4, fixed_abs, tag = 'smem constant byte address 0x4 - core index']
  #allocation1 [shape = 'u32[144,128]{1,0:T(1,128)}', space=vmem, size = 0x12000, scoped, tag = 'internal scratch']
  %s0 = inlined_call_operand.vmem [shape: bf16[16,128], index: 0, kind: input, shape index: {}]
  %s1 = inlined_call_operand.vmem [shape: bf16[128,128], index: 1, kind: input, shape index: {}]
  %s2 = inlined_call_operand.vmem [shape: f32[1,128], index: 2, kind: input, shape index: {}]
  %s3 = inlined_call_operand.vmem [shape: bf16[128,256], index: 3, kind: input, shape index: {}]
  %s4 = inlined_call_operand.vmem [shape: f32[1,256], index: 4, kind: input, shape index: {}]
  %s5 = inlined_call_operand.vmem [shape: bf16[256,784], index: 5, kind: input, shape index: {}]
  %s6 = inlined_call_operand.vmem [shape: f32[1,784], index: 6, kind: input, shape index: {}]
  %s7 = inlined_call_operand.hbm [shape: f32[16,784], index: 7, kind: output, shape index: {}]
  %s8 = sld [smem:[#allocation0]]
  $region38: #{tpu_custom_call.1} parent=0
    _
  %s10 = ssub.s32 1, %s8
  %s11 = scalar_select 0, %s10, %s8
  $region1: #{tpu_custom_call.1} parent=0
    #allocation2 [shape = 'u8[57344]{0}', space=vmem, size = 0xe000, scoped, tag = 'output window, operand 0, single buffered']
    #allocation3 [shape = 's32[1]{0}', space=sflag, size = 0x4, scoped, tag = 'scoped memory for tpu_custom_call.1']
    %12 = vsyncpa [#allocation3], 0
    // Predicated region
    $region2: #{tpu_custom_call.1} parent=1 // pred_check
      _
    $region3: #{tpu_custom_call.1} parent=1 // pred_check_branch
      %14 = sbr.rel (0) target = $region5
    $region4: #{tpu_custom_call.1} parent=1 // pred_region
      _
    $region5: #{tpu_custom_call.1} parent=1 // pred_fallthru
      _
    // Predicated region
    $region6: #{tpu_custom_call.1} parent=1 // pred_check
      _
    $region7: #{tpu_custom_call.1} parent=1 // pred_check_branch
      %16 = sbr.rel (0) target = $region9
    $region8: #{tpu_custom_call.1} parent=1 // pred_region
      _
    $region9: #{tpu_custom_call.1} parent=1 // pred_fallthru
      _
    // Predicated region
    $region10: #{tpu_custom_call.1} parent=1 // pred_check
      _
    $region11: #{tpu_custom_call.1} parent=1 // pred_check_branch
      %18 = sbr.rel (0) target = $region13
    $region12: #{tpu_custom_call.1} parent=1 // pred_region
      _
    $region13: #{tpu_custom_call.1} parent=1 // pred_fallthru
      _
    // Predicated region
    $region14: #{tpu_custom_call.1} parent=1 // pred_check
      _
    $region15: #{tpu_custom_call.1} parent=1 // pred_check_branch
      %20 = sbr.rel (0) target = $region17
    $region16: #{tpu_custom_call.1} parent=1 // pred_region
      _
    $region17: #{tpu_custom_call.1} parent=1 // pred_fallthru
      _
    // Predicated region
    $region18: #{tpu_custom_call.1} parent=1 // pred_check
      _
    $region19: #{tpu_custom_call.1} parent=1 // pred_check_branch
      %22 = sbr.rel (0) target = $region21
    $region20: #{tpu_custom_call.1} parent=1 // pred_region
      _
    $region21: #{tpu_custom_call.1} parent=1 // pred_fallthru
      _
    // Predicated region
    $region22: #{tpu_custom_call.1} parent=1 // pred_check
      _
    $region23: #{tpu_custom_call.1} parent=1 // pred_check_branch
      %24 = sbr.rel (0) target = $region25
    $region24: #{tpu_custom_call.1} parent=1 // pred_region
      _
    $region25: #{tpu_custom_call.1} parent=1 // pred_fallthru
      _
    // Predicated region
    $region26: #{tpu_custom_call.1} parent=1 // pred_check
      _
    $region27: #{tpu_custom_call.1} parent=1 // pred_check_branch
      %26 = sbr.rel (0) target = $region29
    $region28: #{tpu_custom_call.1} parent=1 // pred_region
      _
    $region29: #{tpu_custom_call.1} parent=1 // pred_fallthru
      _
    %v28 = vld [vmem:[%s0] sm:$0xf]
    %v29 = vld [vmem:[%s0 + $0x4] sm:$0xf]
    %v30 = vld [vmem:[%s1] sm:$0xf]
    %v31 = vld [vmem:[%s1 + $0x4] sm:$0xf]
    %v32 = vld [vmem:[%s1 + $0x8] sm:$0xf]
    %v33 = vld [vmem:[%s1 + $0xc] sm:$0xf]
    %v34 = vld [vmem:[%s1 + $0x10] sm:$0xf]
    %v35 = vld [vmem:[%s1 + $0x14] sm:$0xf]
    %v36 = vld [vmem:[%s1 + $0x18] sm:$0xf]
    %v37 = vld [vmem:[%s1 + $0x1c] sm:$0xf]
    %v38 = vld [vmem:[%s1 + $0x20] sm:$0xf]
    %v39 = vld [vmem:[%s1 + $0x24] sm:$0xf]
    %v40 = vld [vmem:[%s1 + $0x28] sm:$0xf]
    %v41 = vld [vmem:[%s1 + $0x2c] sm:$0xf]
    %v42 = vld [vmem:[%s1 + $0x30] sm:$0xf]
    %v43 = vld [vmem:[%s1 + $0x34] sm:$0xf]
    %v44 = vld [vmem:[%s1 + $0x38] sm:$0xf]
    %v45 = vld [vmem:[%s1 + $0x3c] sm:$0xf]
    %v46 = vld [vmem:[%s2] sm:$0x1]
    %v48 = vlaneseq
    %v49 = vshrl.u32 %v48, 7
    %v50 = vsub.s32 0, %v49
    %v51 = vrot.slane %v46, %v50
    %v55 = vunpack.c.l.b16 %v28
    %v56 = vunpack.c.l.b16 %v29
    %v57 = vpack.c.b16 %v56, %v55
    %v75 = vunpack.c.l.b16 %v30
    %v76 = vunpack.c.l.b16 %v31
    %v77 = vunpack.c.l.b16 %v32
    %v78 = vunpack.c.l.b16 %v33
    %v79 = vunpack.c.l.b16 %v34
    %v80 = vunpack.c.l.b16 %v35
    %v81 = vunpack.c.l.b16 %v36
    %v82 = vunpack.c.l.b16 %v37
    %v83 = vunpack.c.l.b16 %v38
    %v84 = vunpack.c.l.b16 %v39
    %v85 = vunpack.c.l.b16 %v40
    %v86 = vunpack.c.l.b16 %v41
    %v87 = vunpack.c.l.b16 %v42
    %v88 = vunpack.c.l.b16 %v43
    %v89 = vunpack.c.l.b16 %v44
    %v90 = vunpack.c.l.b16 %v45
    %v91 = vpack.c.b16 %v76, %v75
    %v92 = vpack.c.b16 %v78, %v77
    %v93 = vpack.c.b16 %v80, %v79
    %v94 = vpack.c.b16 %v82, %v81
    %v95 = vpack.c.b16 %v84, %v83
    %v96 = vpack.c.b16 %v86, %v85
    %v97 = vpack.c.b16 %v88, %v87
    %v98 = vpack.c.b16 %v90, %v89
    %107 = vmatprep.subr.bf16.mxu0 0
    %108 = vmatpush1.bf16.msra.mxu0 %v91
    %109 = vmatprep.subr.bf16.mxu0 0
    %110 = vmatpush1.bf16.msra.mxu0 %v92
    %111 = vmatprep.subr.bf16.mxu0 0
    %112 = vmatpush1.bf16.msra.mxu0 %v93
    %113 = vmatprep.subr.bf16.mxu0 0
    %114 = vmatpush1.bf16.msra.mxu0 %v94
    %115 = vmatprep.subr.bf16.mxu0 0
    %116 = vmatpush1.bf16.msra.mxu0 %v95
    %117 = vmatprep.subr.bf16.mxu0 0
    %118 = vmatpush1.bf16.msra.mxu0 %v96
    %119 = vmatprep.subr.bf16.mxu0 0
    %120 = vmatpush1.bf16.msra.mxu0 %v97
    %121 = vmatprep.subr.bf16.mxu0 0
    %122 = vmatpush1.bf16.msra.mxu0 %v98
    %123 = vmatprep.subr.bf16.mxu0 0
    %124 = vmatpush1.bf16.msra.mxu0 0
    %125 = vmatprep.subr.bf16.mxu0 0
    %126 = vmatpush1.bf16.msra.mxu0 0
    %127 = vmatprep.subr.bf16.mxu0 0
    %128 = vmatpush1.bf16.msra.mxu0 0
    %129 = vmatprep.subr.bf16.mxu0 0
    %130 = vmatpush1.bf16.msra.mxu0 0
    %131 = vmatprep.subr.bf16.mxu0 0
    %132 = vmatpush1.bf16.msra.mxu0 0
    %133 = vmatprep.subr.bf16.mxu0 0
    %134 = vmatpush1.bf16.msra.mxu0 0
    %135 = vmatprep.subr.bf16.mxu0 0
    %136 = vmatpush1.bf16.msra.mxu0 0
    %137 = vmatprep.subr.bf16.mxu0 0
    %138 = vmatpush1.bf16.msra.mxu0 0
    %139 = vmatprep.mubr.bf16.mxu0 0
    %140 = vmatmul.mubr.bf16.gmra.mrb[0].mxu0 %v57
    %v141 = vpop.f32.mrb[0].mxu0
    %v142 = vadd.f32 %v51, %v141
    %v143 = vpop.f32.mrb[0].mxu0
    %v144 = vpop.f32.mrb[0].mxu0
    %v145 = vadd.f32 %v51, %v144
    %v146 = vpop.f32.mrb[0].mxu0
    %147 = vdwg.mxu0
    %v148 = vmax.f32 %v142, 0.0
    %v149 = vmax.f32 %v145, 0.0
    %v150 = vpack.c.bf16 %v149, %v148
    %v151 = vld [vmem:[%s3] sm:$0xff]
    %v152 = vld [vmem:[%s3 + $0x8] sm:$0xff]
    %v153 = vld [vmem:[%s3 + $0x10] sm:$0xff]
    %v154 = vld [vmem:[%s3 + $0x18] sm:$0xff]
    %v155 = vld [vmem:[%s3 + $0x20] sm:$0xff]
    %v156 = vld [vmem:[%s3 + $0x28] sm:$0xff]
    %v157 = vld [vmem:[%s3 + $0x30] sm:$0xff]
    %v158 = vld [vmem:[%s3 + $0x38] sm:$0xff]
    %v159 = vld [vmem:[%s3 + $0x40] sm:$0xff]
    %v160 = vld [vmem:[%s3 + $0x48] sm:$0xff]
    %v161 = vld [vmem:[%s3 + $0x50] sm:$0xff]
    %v162 = vld [vmem:[%s3 + $0x58] sm:$0xff]
    %v163 = vld [vmem:[%s3 + $0x60] sm:$0xff]
    %v164 = vld [vmem:[%s3 + $0x68] sm:$0xff]
    %v165 = vld [vmem:[%s3 + $0x70] sm:$0xff]
    %v166 = vld [vmem:[%s3 + $0x78] sm:$0xff]
    %v167 = vld [vmem:[%s4] sm:$0x3]
    %v169 = vlaneseq
    %v170 = vshrl.u32 %v169, 7
    %v171 = vsub.s32 0, %v170
    %v172 = vrot.slane %v167, %v171
    %v173 = vlaneseq
    %v174 = vshrl.u32 %v173, 7
    %v175 = vsub.s32 1, %v174
    %v176 = vrot.slane %v167, %v175
    %v195 = vunpack.c.l.b16 %v151
    %v196 = vunpack.c.h.b16 %v151
    %v197 = vunpack.c.l.b16 %v152
    %v198 = vunpack.c.h.b16 %v152
    %v199 = vunpack.c.l.b16 %v153
    %v200 = vunpack.c.h.b16 %v153
    %v201 = vunpack.c.l.b16 %v154
    %v202 = vunpack.c.h.b16 %v154
    %v203 = vunpack.c.l.b16 %v155
    %v204 = vunpack.c.h.b16 %v155
    %v205 = vunpack.c.l.b16 %v156
    %v206 = vunpack.c.h.b16 %v156
    %v207 = vunpack.c.l.b16 %v157
    %v208 = vunpack.c.h.b16 %v157
    %v209 = vunpack.c.l.b16 %v158
    %v210 = vunpack.c.h.b16 %v158
    %v211 = vunpack.c.l.b16 %v159
    %v212 = vunpack.c.h.b16 %v159
    %v213 = vunpack.c.l.b16 %v160
    %v214 = vunpack.c.h.b16 %v160
    %v215 = vunpack.c.l.b16 %v161
    %v216 = vunpack.c.h.b16 %v161
    %v217 = vunpack.c.l.b16 %v162
    %v218 = vunpack.c.h.b16 %v162
    %v219 = vunpack.c.l.b16 %v163
    %v220 = vunpack.c.h.b16 %v163
    %v221 = vunpack.c.l.b16 %v164
    %v222 = vunpack.c.h.b16 %v164
    %v223 = vunpack.c.l.b16 %v165
    %v224 = vunpack.c.h.b16 %v165
    %v225 = vunpack.c.l.b16 %v166
    %v226 = vunpack.c.h.b16 %v166
    %v227 = vpack.c.b16 %v197, %v195
    %v228 = vpack.c.b16 %v198, %v196
    %v229 = vpack.c.b16 %v201, %v199
    %v230 = vpack.c.b16 %v202, %v200
    %v231 = vpack.c.b16 %v205, %v203
    %v232 = vpack.c.b16 %v206, %v204
    %v233 = vpack.c.b16 %v209, %v207
    %v234 = vpack.c.b16 %v210, %v208
    %v235 = vpack.c.b16 %v213, %v211
    %v236 = vpack.c.b16 %v214, %v212
    %v237 = vpack.c.b16 %v217, %v215
    %v238 = vpack.c.b16 %v218, %v216
    %v239 = vpack.c.b16 %v221, %v219
    %v240 = vpack.c.b16 %v222, %v220
    %v241 = vpack.c.b16 %v225, %v223
    %v242 = vpack.c.b16 %v226, %v224
    %259 = vmatprep.subr.bf16.mxu0 %v228
    %260 = vmatpush1.bf16.msra.mxu0 %v227
    %261 = vmatprep.subr.bf16.mxu0 %v230
    %262 = vmatpush1.bf16.msra.mxu0 %v229
    %263 = vmatprep.subr.bf16.mxu0 %v232
    %264 = vmatpush1.bf16.msra.mxu0 %v231
    %265 = vmatprep.subr.bf16.mxu0 %v234
    %266 = vmatpush1.bf16.msra.mxu0 %v233
    %267 = vmatprep.subr.bf16.mxu0 %v236
    %268 = vmatpush1.bf16.msra.mxu0 %v235
    %269 = vmatprep.subr.bf16.mxu0 %v238
    %270 = vmatpush1.bf16.msra.mxu0 %v237
    %271 = vmatprep.subr.bf16.mxu0 %v240
    %272 = vmatpush1.bf16.msra.mxu0 %v239
    %273 = vmatprep.subr.bf16.mxu0 %v242
    %274 = vmatpush1.bf16.msra.mxu0 %v241
    %275 = vmatprep.subr.bf16.mxu0 0
    %276 = vmatpush1.bf16.msra.mxu0 0
    %277 = vmatprep.subr.bf16.mxu0 0
    %278 = vmatpush1.bf16.msra.mxu0 0
    %279 = vmatprep.subr.bf16.mxu0 0
    %280 = vmatpush1.bf16.msra.mxu0 0
    %281 = vmatprep.subr.bf16.mxu0 0
    %282 = vmatpush1.bf16.msra.mxu0 0
    %283 = vmatprep.subr.bf16.mxu0 0
    %284 = vmatpush1.bf16.msra.mxu0 0
    %285 = vmatprep.subr.bf16.mxu0 0
    %286 = vmatpush1.bf16.msra.mxu0 0
    %287 = vmatprep.subr.bf16.mxu0 0
    %288 = vmatpush1.bf16.msra.mxu0 0
    %289 = vmatprep.subr.bf16.mxu0 0
    %290 = vmatpush1.bf16.msra.mxu0 0
    %291 = vmatprep.mubr.bf16.mxu0 0
    %292 = vmatmul.mubr.bf16.gmra.mrb[0].mxu0 %v150
    %v293 = vpop.f32.mrb[0].mxu0
    %v294 = vadd.f32 %v172, %v293
    %v295 = vpop.f32.mrb[0].mxu0
    %v296 = vadd.f32 %v176, %v295
    %v297 = vpop.f32.mrb[0].mxu0
    %v298 = vadd.f32 %v172, %v297
    %v299 = vpop.f32.mrb[0].mxu0
    %v300 = vadd.f32 %v176, %v299
    %301 = vdwg.mxu0
    %v302 = vmax.f32 %v294, 0.0
    %v303 = vmax.f32 %v296, 0.0
    %v304 = vmax.f32 %v298, 0.0
    %v305 = vmax.f32 %v300, 0.0
    %v306 = vpack.c.bf16 %v304, %v302
    %v307 = vpack.c.bf16 %v305, %v303
    %v308 = vld [vmem:[%s5] sm:$0xff]
    %v309 = vld [vmem:[%s5 + $0x8] sm:$0xff]
    %v310 = vld [vmem:[%s5 + $0x10] sm:$0xff]
    %v311 = vld [vmem:[%s5 + $0x18] sm:$0xf]
    %v312 = vld [vmem:[%s5 + $0x1c] sm:$0xff]
    %v313 = vld [vmem:[%s5 + $0x24] sm:$0xff]
    %v314 = vld [vmem:[%s5 + $0x2c] sm:$0xff]
    %v315 = vld [vmem:[%s5 + $0x34] sm:$0xf]
    %v316 = vld [vmem:[%s5 + $0x38] sm:$0xff]
    %v317 = vld [vmem:[%s5 + $0x40] sm:$0xff]
    %v318 = vld [vmem:[%s5 + $0x48] sm:$0xff]
    %v319 = vld [vmem:[%s5 + $0x50] sm:$0xf]
    %v320 = vld [vmem:[%s5 + $0x54] sm:$0xff]
    %v321 = vld [vmem:[%s5 + $0x5c] sm:$0xff]
    %v322 = vld [vmem:[%s5 + $0x64] sm:$0xff]
    %v323 = vld [vmem:[%s5 + $0x6c] sm:$0xf]
    %v324 = vld [vmem:[%s5 + $0x70] sm:$0xff]
    %v325 = vld [vmem:[%s5 + $0x78] sm:$0xff]
    %v326 = vld [vmem:[%s5 + $0x80] sm:$0xff]
    %v327 = vld [vmem:[%s5 + $0x88] sm:$0xf]
    %v328 = vld [vmem:[%s5 + $0x8c] sm:$0xff]
    %v329 = vld [vmem:[%s5 + $0x94] sm:$0xff]
    %v330 = vld [vmem:[%s5 + $0x9c] sm:$0xff]
    %v331 = vld [vmem:[%s5 + $0xa4] sm:$0xf]
    %v332 = vld [vmem:[%s5 + $0xa8] sm:$0xff]
    %v333 = vld [vmem:[%s5 + $0xb0] sm:$0xff]
    %v334 = vld [vmem:[%s5 + $0xb8] sm:$0xff]
    %v335 = vld [vmem:[%s5 + $0xc0] sm:$0xf]
    %v336 = vld [vmem:[%s5 + $0xc4] sm:$0xff]
    %v337 = vld [vmem:[%s5 + $0xcc] sm:$0xff]
    %v338 = vld [vmem:[%s5 + $0xd4] sm:$0xff]
    %v339 = vld [vmem:[%s5 + $0xdc] sm:$0xf]
    %v340 = vld [vmem:[%s5 + $0xe0] sm:$0xff]
    %v341 = vld [vmem:[%s5 + $0xe8] sm:$0xff]
    %v342 = vld [vmem:[%s5 + $0xf0] sm:$0xff]
    %v343 = vld [vmem:[%s5 + $0xf8] sm:$0xf]
    %v344 = vld [vmem:[%s5 + $0xfc] sm:$0xff]
    %v345 = vld [vmem:[%s5 + $0x104] sm:$0xff]
    %v346 = vld [vmem:[%s5 + $0x10c] sm:$0xff]
    %v347 = vld [vmem:[%s5 + $0x114] sm:$0xf]
    %v348 = vld [vmem:[%s5 + $0x118] sm:$0xff]
    %v349 = vld [vmem:[%s5 + $0x120] sm:$0xff]
    %v350 = vld [vmem:[%s5 + $0x128] sm:$0xff]
    %v351 = vld [vmem:[%s5 + $0x130] sm:$0xf]
    %v352 = vld [vmem:[%s5 + $0x134] sm:$0xff]
    %v353 = vld [vmem:[%s5 + $0x13c] sm:$0xff]
    %v354 = vld [vmem:[%s5 + $0x144] sm:$0xff]
    %v355 = vld [vmem:[%s5 + $0x14c] sm:$0xf]
    %v356 = vld [vmem:[%s5 + $0x150] sm:$0xff]
    %v357 = vld [vmem:[%s5 + $0x158] sm:$0xff]
    %v358 = vld [vmem:[%s5 + $0x160] sm:$0xff]
    %v359 = vld [vmem:[%s5 + $0x168] sm:$0xf]
    %v360 = vld [vmem:[%s5 + $0x16c] sm:$0xff]
    %v361 = vld [vmem:[%s5 + $0x174] sm:$0xff]
    %v362 = vld [vmem:[%s5 + $0x17c] sm:$0xff]
    %v363 = vld [vmem:[%s5 + $0x184] sm:$0xf]
    %v364 = vld [vmem:[%s5 + $0x188] sm:$0xff]
    %v365 = vld [vmem:[%s5 + $0x190] sm:$0xff]
    %v366 = vld [vmem:[%s5 + $0x198] sm:$0xff]
    %v367 = vld [vmem:[%s5 + $0x1a0] sm:$0xf]
    %v368 = vld [vmem:[%s5 + $0x1a4] sm:$0xff]
    %v369 = vld [vmem:[%s5 + $0x1ac] sm:$0xff]
    %v370 = vld [vmem:[%s5 + $0x1b4] sm:$0xff]
    %v371 = vld [vmem:[%s5 + $0x1bc] sm:$0xf]
    %v372 = vld [vmem:[%s5 + $0x1c0] sm:$0xff]
    %v373 = vld [vmem:[%s5 + $0x1c8] sm:$0xff]
    %v374 = vld [vmem:[%s5 + $0x1d0] sm:$0xff]
    %v375 = vld [vmem:[%s5 + $0x1d8] sm:$0xf]
    %v376 = vld [vmem:[%s5 + $0x1dc] sm:$0xff]
    %v377 = vld [vmem:[%s5 + $0x1e4] sm:$0xff]
    %v378 = vld [vmem:[%s5 + $0x1ec] sm:$0xff]
    %v379 = vld [vmem:[%s5 + $0x1f4] sm:$0xf]
    %v380 = vld [vmem:[%s5 + $0x1f8] sm:$0xff]
    %v381 = vld [vmem:[%s5 + $0x200] sm:$0xff]
    %v382 = vld [vmem:[%s5 + $0x208] sm:$0xff]
    %v383 = vld [vmem:[%s5 + $0x210] sm:$0xf]
    %v384 = vld [vmem:[%s5 + $0x214] sm:$0xff]
    %v385 = vld [vmem:[%s5 + $0x21c] sm:$0xff]
    %v386 = vld [vmem:[%s5 + $0x224] sm:$0xff]
    %v387 = vld [vmem:[%s5 + $0x22c] sm:$0xf]
    %v388 = vld [vmem:[%s5 + $0x230] sm:$0xff]
    %v389 = vld [vmem:[%s5 + $0x238] sm:$0xff]
    %v390 = vld [vmem:[%s5 + $0x240] sm:$0xff]
    %v391 = vld [vmem:[%s5 + $0x248] sm:$0xf]
    %v392 = vld [vmem:[%s5 + $0x24c] sm:$0xff]
    %v393 = vld [vmem:[%s5 + $0x254] sm:$0xff]
    %v394 = vld [vmem:[%s5 + $0x25c] sm:$0xff]
    %v395 = vld [vmem:[%s5 + $0x264] sm:$0xf]
    %v396 = vld [vmem:[%s5 + $0x268] sm:$0xff]
    %v397 = vld [vmem:[%s5 + $0x270] sm:$0xff]
    %v398 = vld [vmem:[%s5 + $0x278] sm:$0xff]
    %v399 = vld [vmem:[%s5 + $0x280] sm:$0xf]
    %v400 = vld [vmem:[%s5 + $0x284] sm:$0xff]
    %v401 = vld [vmem:[%s5 + $0x28c] sm:$0xff]
    %v402 = vld [vmem:[%s5 + $0x294] sm:$0xff]
    %v403 = vld [vmem:[%s5 + $0x29c] sm:$0xf]
    %v404 = vld [vmem:[%s5 + $0x2a0] sm:$0xff]
    %v405 = vld [vmem:[%s5 + $0x2a8] sm:$0xff]
    %v406 = vld [vmem:[%s5 + $0x2b0] sm:$0xff]
    %v407 = vld [vmem:[%s5 + $0x2b8] sm:$0xf]
    %v408 = vld [vmem:[%s5 + $0x2bc] sm:$0xff]
    %v409 = vld [vmem:[%s5 + $0x2c4] sm:$0xff]
    %v410 = vld [vmem:[%s5 + $0x2cc] sm:$0xff]
    %v411 = vld [vmem:[%s5 + $0x2d4] sm:$0xf]
    %v412 = vld [vmem:[%s5 + $0x2d8] sm:$0xff]
    %v413 = vld [vmem:[%s5 + $0x2e0] sm:$0xff]
    %v414 = vld [vmem:[%s5 + $0x2e8] sm:$0xff]
    %v415 = vld [vmem:[%s5 + $0x2f0] sm:$0xf]
    %v416 = vld [vmem:[%s5 + $0x2f4] sm:$0xff]
    %v417 = vld [vmem:[%s5 + $0x2fc] sm:$0xff]
    %v418 = vld [vmem:[%s5 + $0x304] sm:$0xff]
    %v419 = vld [vmem:[%s5 + $0x30c] sm:$0xf]
    %v420 = vld [vmem:[%s5 + $0x310] sm:$0xff]
    %v421 = vld [vmem:[%s5 + $0x318] sm:$0xff]
    %v422 = vld [vmem:[%s5 + $0x320] sm:$0xff]
    %v423 = vld [vmem:[%s5 + $0x328] sm:$0xf]
    %v424 = vld [vmem:[%s5 + $0x32c] sm:$0xff]
    %v425 = vld [vmem:[%s5 + $0x334] sm:$0xff]
    %v426 = vld [vmem:[%s5 + $0x33c] sm:$0xff]
    %v427 = vld [vmem:[%s5 + $0x344] sm:$0xf]
    %v428 = vld [vmem:[%s5 + $0x348] sm:$0xff]
    %v429 = vld [vmem:[%s5 + $0x350] sm:$0xff]
    %v430 = vld [vmem:[%s5 + $0x358] sm:$0xff]
    %v431 = vld [vmem:[%s5 + $0x360] sm:$0xf]
    %v432 = vld [vmem:[%s5 + $0x364] sm:$0xff]
    %v433 = vld [vmem:[%s5 + $0x36c] sm:$0xff]
    %v434 = vld [vmem:[%s5 + $0x374] sm:$0xff]
    %v435 = vld [vmem:[%s5 + $0x37c] sm:$0xf]
    %v436 = vld [vmem:[%s6] sm:$0x7f]
    %v438 = vlaneseq
    %v439 = vshrl.u32 %v438, 7
    %v440 = vsub.s32 0, %v439
    %v441 = vrot.slane %v436, %v440
    %v442 = vlaneseq
    %v443 = vshrl.u32 %v442, 7
    %v444 = vsub.s32 1, %v443
    %v445 = vrot.slane %v436, %v444
    %v446 = vlaneseq
    %v447 = vshrl.u32 %v446, 7
    %v448 = vsub.s32 2, %v447
    %v449 = vrot.slane %v436, %v448
    %v450 = vlaneseq
    %v451 = vshrl.u32 %v450, 7
    %v452 = vsub.s32 3, %v451
    %v453 = vrot.slane %v436, %v452
    %v454 = vlaneseq
    %v455 = vshrl.u32 %v454, 7
    %v456 = vsub.s32 4, %v455
    %v457 = vrot.slane %v436, %v456
    %v458 = vlaneseq
    %v459 = vshrl.u32 %v458, 7
    %v460 = vsub.s32 5, %v459
    %v461 = vrot.slane %v436, %v460
    %v462 = vlaneseq
    %v463 = vshrl.u32 %v462, 7
    %v464 = vsub.s32 6, %v463
    %v465 = vrot.slane %v436, %v464
    %v601 = vunpack.c.l.b16 %v308
    %v602 = vunpack.c.h.b16 %v308
    %v603 = vunpack.c.l.b16 %v309
    %v604 = vunpack.c.h.b16 %v309
    %v605 = vunpack.c.l.b16 %v310
    %v606 = vunpack.c.h.b16 %v310
    %v607 = vunpack.c.l.b16 %v311
    %v608 = vunpack.c.l.b16 %v312
    %v609 = vunpack.c.h.b16 %v312
    %v610 = vunpack.c.l.b16 %v313
    %v611 = vunpack.c.h.b16 %v313
    %v612 = vunpack.c.l.b16 %v314
    %v613 = vunpack.c.h.b16 %v314
    %v614 = vunpack.c.l.b16 %v315
    %v615 = vunpack.c.l.b16 %v316
    %v616 = vunpack.c.h.b16 %v316
    %v617 = vunpack.c.l.b16 %v317
    %v618 = vunpack.c.h.b16 %v317
    %v619 = vunpack.c.l.b16 %v318
    %v620 = vunpack.c.h.b16 %v318
    %v621 = vunpack.c.l.b16 %v319
    %v622 = vunpack.c.l.b16 %v320
    %v623 = vunpack.c.h.b16 %v320
    %v624 = vunpack.c.l.b16 %v321
    %v625 = vunpack.c.h.b16 %v321
    %v626 = vunpack.c.l.b16 %v322
    %v627 = vunpack.c.h.b16 %v322
    %v628 = vunpack.c.l.b16 %v323
    %v629 = vunpack.c.l.b16 %v324
    %v630 = vunpack.c.h.b16 %v324
    %v631 = vunpack.c.l.b16 %v325
    %v632 = vunpack.c.h.b16 %v325
    %v633 = vunpack.c.l.b16 %v326
    %v634 = vunpack.c.h.b16 %v326
    %v635 = vunpack.c.l.b16 %v327
    %v636 = vunpack.c.l.b16 %v328
    %v637 = vunpack.c.h.b16 %v328
    %v638 = vunpack.c.l.b16 %v329
    %v639 = vunpack.c.h.b16 %v329
    %v640 = vunpack.c.l.b16 %v330
    %v641 = vunpack.c.h.b16 %v330
    %v642 = vunpack.c.l.b16 %v331
    %v643 = vunpack.c.l.b16 %v332
    %v644 = vunpack.c.h.b16 %v332
    %v645 = vunpack.c.l.b16 %v333
    %v646 = vunpack.c.h.b16 %v333
    %v647 = vunpack.c.l.b16 %v334
    %v648 = vunpack.c.h.b16 %v334
    %v649 = vunpack.c.l.b16 %v335
    %v650 = vunpack.c.l.b16 %v336
    %v651 = vunpack.c.h.b16 %v336
    %v652 = vunpack.c.l.b16 %v337
    %v653 = vunpack.c.h.b16 %v337
    %v654 = vunpack.c.l.b16 %v338
    %v655 = vunpack.c.h.b16 %v338
    %v656 = vunpack.c.l.b16 %v339
    %v657 = vunpack.c.l.b16 %v340
    %v658 = vunpack.c.h.b16 %v340
    %v659 = vunpack.c.l.b16 %v341
    %v660 = vunpack.c.h.b16 %v341
    %v661 = vunpack.c.l.b16 %v342
    %v662 = vunpack.c.h.b16 %v342
    %v663 = vunpack.c.l.b16 %v343
    %v664 = vunpack.c.l.b16 %v344
    %v665 = vunpack.c.h.b16 %v344
    %v666 = vunpack.c.l.b16 %v345
    %v667 = vunpack.c.h.b16 %v345
    %v668 = vunpack.c.l.b16 %v346
    %v669 = vunpack.c.h.b16 %v346
    %v670 = vunpack.c.l.b16 %v347
    %v671 = vunpack.c.l.b16 %v348
    %v672 = vunpack.c.h.b16 %v348
    %v673 = vunpack.c.l.b16 %v349
    %v674 = vunpack.c.h.b16 %v349
    %v675 = vunpack.c.l.b16 %v350
    %v676 = vunpack.c.h.b16 %v350
    %v677 = vunpack.c.l.b16 %v351
    %v678 = vunpack.c.l.b16 %v352
    %v679 = vunpack.c.h.b16 %v352
    %v680 = vunpack.c.l.b16 %v353
    %v681 = vunpack.c.h.b16 %v353
    %v682 = vunpack.c.l.b16 %v354
    %v683 = vunpack.c.h.b16 %v354
    %v684 = vunpack.c.l.b16 %v355
    %v685 = vunpack.c.l.b16 %v356
    %v686 = vunpack.c.h.b16 %v356
    %v687 = vunpack.c.l.b16 %v357
    %v688 = vunpack.c.h.b16 %v357
    %v689 = vunpack.c.l.b16 %v358
    %v690 = vunpack.c.h.b16 %v358
    %v691 = vunpack.c.l.b16 %v359
    %v692 = vunpack.c.l.b16 %v360
    %v693 = vunpack.c.h.b16 %v360
    %v694 = vunpack.c.l.b16 %v361
    %v695 = vunpack.c.h.b16 %v361
    %v696 = vunpack.c.l.b16 %v362
    %v697 = vunpack.c.h.b16 %v362
    %v698 = vunpack.c.l.b16 %v363
    %v699 = vunpack.c.l.b16 %v364
    %v700 = vunpack.c.h.b16 %v364
    %v701 = vunpack.c.l.b16 %v365
    %v702 = vunpack.c.h.b16 %v365
    %v703 = vunpack.c.l.b16 %v366
    %v704 = vunpack.c.h.b16 %v366
    %v705 = vunpack.c.l.b16 %v367
    %v706 = vunpack.c.l.b16 %v368
    %v707 = vunpack.c.h.b16 %v368
    %v708 = vunpack.c.l.b16 %v369
    %v709 = vunpack.c.h.b16 %v369
    %v710 = vunpack.c.l.b16 %v370
    %v711 = vunpack.c.h.b16 %v370
    %v712 = vunpack.c.l.b16 %v371
    %v713 = vunpack.c.l.b16 %v372
    %v714 = vunpack.c.h.b16 %v372
    %v715 = vunpack.c.l.b16 %v373
    %v716 = vunpack.c.h.b16 %v373
    %v717 = vunpack.c.l.b16 %v374
    %v718 = vunpack.c.h.b16 %v374
    %v719 = vunpack.c.l.b16 %v375
    %v720 = vunpack.c.l.b16 %v376
    %v721 = vunpack.c.h.b16 %v376
    %v722 = vunpack.c.l.b16 %v377
    %v723 = vunpack.c.h.b16 %v377
    %v724 = vunpack.c.l.b16 %v378
    %v725 = vunpack.c.h.b16 %v378
    %v726 = vunpack.c.l.b16 %v379
    %v727 = vunpack.c.l.b16 %v380
    %v728 = vunpack.c.h.b16 %v380
    %v729 = vunpack.c.l.b16 %v381
    %v730 = vunpack.c.h.b16 %v381
    %v731 = vunpack.c.l.b16 %v382
    %v732 = vunpack.c.h.b16 %v382
    %v733 = vunpack.c.l.b16 %v383
    %v734 = vunpack.c.l.b16 %v384
    %v735 = vunpack.c.h.b16 %v384
    %v736 = vunpack.c.l.b16 %v385
    %v737 = vunpack.c.h.b16 %v385
    %v738 = vunpack.c.l.b16 %v386
    %v739 = vunpack.c.h.b16 %v386
    %v740 = vunpack.c.l.b16 %v387
    %v741 = vunpack.c.l.b16 %v388
    %v742 = vunpack.c.h.b16 %v388
    %v743 = vunpack.c.l.b16 %v389
    %v744 = vunpack.c.h.b16 %v389
    %v745 = vunpack.c.l.b16 %v390
    %v746 = vunpack.c.h.b16 %v390
    %v747 = vunpack.c.l.b16 %v391
    %v748 = vunpack.c.l.b16 %v392
    %v749 = vunpack.c.h.b16 %v392
    %v750 = vunpack.c.l.b16 %v393
    %v751 = vunpack.c.h.b16 %v393
    %v752 = vunpack.c.l.b16 %v394
    %v753 = vunpack.c.h.b16 %v394
    %v754 = vunpack.c.l.b16 %v395
    %v755 = vunpack.c.l.b16 %v396
    %v756 = vunpack.c.h.b16 %v396
    %v757 = vunpack.c.l.b16 %v397
    %v758 = vunpack.c.h.b16 %v397
    %v759 = vunpack.c.l.b16 %v398
    %v760 = vunpack.c.h.b16 %v398
    %v761 = vunpack.c.l.b16 %v399
    %v762 = vunpack.c.l.b16 %v400
    %v763 = vunpack.c.h.b16 %v400
    %v764 = vunpack.c.l.b16 %v401
    %v765 = vunpack.c.h.b16 %v401
    %v766 = vunpack.c.l.b16 %v402
    %v767 = vunpack.c.h.b16 %v402
    %v768 = vunpack.c.l.b16 %v403
    %v769 = vunpack.c.l.b16 %v404
    %v770 = vunpack.c.h.b16 %v404
    %v771 = vunpack.c.l.b16 %v405
    %v772 = vunpack.c.h.b16 %v405
    %v773 = vunpack.c.l.b16 %v406
    %v774 = vunpack.c.h.b16 %v406
    %v775 = vunpack.c.l.b16 %v407
    %v776 = vunpack.c.l.b16 %v408
    %v777 = vunpack.c.h.b16 %v408
    %v778 = vunpack.c.l.b16 %v409
    %v779 = vunpack.c.h.b16 %v409
    %v780 = vunpack.c.l.b16 %v410
    %v781 = vunpack.c.h.b16 %v410
    %v782 = vunpack.c.l.b16 %v411
    %v783 = vunpack.c.l.b16 %v412
    %v784 = vunpack.c.h.b16 %v412
    %v785 = vunpack.c.l.b16 %v413
    %v786 = vunpack.c.h.b16 %v413
    %v787 = vunpack.c.l.b16 %v414
    %v788 = vunpack.c.h.b16 %v414
    %v789 = vunpack.c.l.b16 %v415
    %v790 = vunpack.c.l.b16 %v416
    %v791 = vunpack.c.h.b16 %v416
    %v792 = vunpack.c.l.b16 %v417
    %v793 = vunpack.c.h.b16 %v417
    %v794 = vunpack.c.l.b16 %v418
    %v795 = vunpack.c.h.b16 %v418
    %v796 = vunpack.c.l.b16 %v419
    %v797 = vunpack.c.l.b16 %v420
    %v798 = vunpack.c.h.b16 %v420
    %v799 = vunpack.c.l.b16 %v421
    %v800 = vunpack.c.h.b16 %v421
    %v801 = vunpack.c.l.b16 %v422
    %v802 = vunpack.c.h.b16 %v422
    %v803 = vunpack.c.l.b16 %v423
    %v804 = vunpack.c.l.b16 %v424
    %v805 = vunpack.c.h.b16 %v424
    %v806 = vunpack.c.l.b16 %v425
    %v807 = vunpack.c.h.b16 %v425
    %v808 = vunpack.c.l.b16 %v426
    %v809 = vunpack.c.h.b16 %v426
    %v810 = vunpack.c.l.b16 %v427
    %v811 = vunpack.c.l.b16 %v428
    %v812 = vunpack.c.h.b16 %v428
    %v813 = vunpack.c.l.b16 %v429
    %v814 = vunpack.c.h.b16 %v429
    %v815 = vunpack.c.l.b16 %v430
    %v816 = vunpack.c.h.b16 %v430
    %v817 = vunpack.c.l.b16 %v431
    %v818 = vunpack.c.l.b16 %v432
    %v819 = vunpack.c.h.b16 %v432
    %v820 = vunpack.c.l.b16 %v433
    %v821 = vunpack.c.h.b16 %v433
    %v822 = vunpack.c.l.b16 %v434
    %v823 = vunpack.c.h.b16 %v434
    %v824 = vunpack.c.l.b16 %v435
    %v825 = vpack.c.b16 %v608, %v601
    %v826 = vpack.c.b16 %v609, %v602
    %v827 = vpack.c.b16 %v610, %v603
    %v828 = vpack.c.b16 %v611, %v604
    %v829 = vpack.c.b16 %v612, %v605
    %v830 = vpack.c.b16 %v613, %v606
    %v831 = vpack.c.b16 %v614, %v607
    %v832 = vpack.c.b16 %v622, %v615
    %v833 = vpack.c.b16 %v623, %v616
    %v834 = vpack.c.b16 %v624, %v617
    %v835 = vpack.c.b16 %v625, %v618
    %v836 = vpack.c.b16 %v626, %v619
    %v837 = vpack.c.b16 %v627, %v620
    %v838 = vpack.c.b16 %v628, %v621
    %v839 = vpack.c.b16 %v636, %v629
    %v840 = vpack.c.b16 %v637, %v630
    %v841 = vpack.c.b16 %v638, %v631
    %v842 = vpack.c.b16 %v639, %v632
    %v843 = vpack.c.b16 %v640, %v633
    %v844 = vpack.c.b16 %v641, %v634
    %v845 = vpack.c.b16 %v642, %v635
    %v846 = vpack.c.b16 %v650, %v643
    %v847 = vpack.c.b16 %v651, %v644
    %v848 = vpack.c.b16 %v652, %v645
    %v849 = vpack.c.b16 %v653, %v646
    %v850 = vpack.c.b16 %v654, %v647
    %v851 = vpack.c.b16 %v655, %v648
    %v852 = vpack.c.b16 %v656, %v649
    %v853 = vpack.c.b16 %v664, %v657
    %v854 = vpack.c.b16 %v665, %v658
    %v855 = vpack.c.b16 %v666, %v659
    %v856 = vpack.c.b16 %v667, %v660
    %v857 = vpack.c.b16 %v668, %v661
    %v858 = vpack.c.b16 %v669, %v662
    %v859 = vpack.c.b16 %v670, %v663
    %v860 = vpack.c.b16 %v678, %v671
    %v861 = vpack.c.b16 %v679, %v672
    %v862 = vpack.c.b16 %v680, %v673
    %v863 = vpack.c.b16 %v681, %v674
    %v864 = vpack.c.b16 %v682, %v675
    %v865 = vpack.c.b16 %v683, %v676
    %v866 = vpack.c.b16 %v684, %v677
    %v867 = vpack.c.b16 %v692, %v685
    %v868 = vpack.c.b16 %v693, %v686
    %v869 = vpack.c.b16 %v694, %v687
    %v870 = vpack.c.b16 %v695, %v688
    %v871 = vpack.c.b16 %v696, %v689
    %v872 = vpack.c.b16 %v697, %v690
    %v873 = vpack.c.b16 %v698, %v691
    %v874 = vpack.c.b16 %v706, %v699
    %v875 = vpack.c.b16 %v707, %v700
    %v876 = vpack.c.b16 %v708, %v701
    %v877 = vpack.c.b16 %v709, %v702
    %v878 = vpack.c.b16 %v710, %v703
    %v879 = vpack.c.b16 %v711, %v704
    %v880 = vpack.c.b16 %v712, %v705
    %v881 = vpack.c.b16 %v720, %v713
    %v882 = vpack.c.b16 %v721, %v714
    %v883 = vpack.c.b16 %v722, %v715
    %v884 = vpack.c.b16 %v723, %v716
    %v885 = vpack.c.b16 %v724, %v717
    %v886 = vpack.c.b16 %v725, %v718
    %v887 = vpack.c.b16 %v726, %v719
    %v888 = vpack.c.b16 %v734, %v727
    %v889 = vpack.c.b16 %v735, %v728
    %v890 = vpack.c.b16 %v736, %v729
    %v891 = vpack.c.b16 %v737, %v730
    %v892 = vpack.c.b16 %v738, %v731
    %v893 = vpack.c.b16 %v739, %v732
    %v894 = vpack.c.b16 %v740, %v733
    %v895 = vpack.c.b16 %v748, %v741
    %v896 = vpack.c.b16 %v749, %v742
    %v897 = vpack.c.b16 %v750, %v743
    %v898 = vpack.c.b16 %v751, %v744
    %v899 = vpack.c.b16 %v752, %v745
    %v900 = vpack.c.b16 %v753, %v746
    %v901 = vpack.c.b16 %v754, %v747
    %v902 = vpack.c.b16 %v762, %v755
    %v903 = vpack.c.b16 %v763, %v756
    %v904 = vpack.c.b16 %v764, %v757
    %v905 = vpack.c.b16 %v765, %v758
    %v906 = vpack.c.b16 %v766, %v759
    %v907 = vpack.c.b16 %v767, %v760
    %v908 = vpack.c.b16 %v768, %v761
    %v909 = vpack.c.b16 %v776, %v769
    %v910 = vpack.c.b16 %v777, %v770
    %v911 = vpack.c.b16 %v778, %v771
    %v912 = vpack.c.b16 %v779, %v772
    %v913 = vpack.c.b16 %v780, %v773
    %v914 = vpack.c.b16 %v781, %v774
    %v915 = vpack.c.b16 %v782, %v775
    %v916 = vpack.c.b16 %v790, %v783
    %v917 = vpack.c.b16 %v791, %v784
    %v918 = vpack.c.b16 %v792, %v785
    %v919 = vpack.c.b16 %v793, %v786
    %v920 = vpack.c.b16 %v794, %v787
    %v921 = vpack.c.b16 %v795, %v788
    %v922 = vpack.c.b16 %v796, %v789
    %v923 = vpack.c.b16 %v804, %v797
    %v924 = vpack.c.b16 %v805, %v798
    %v925 = vpack.c.b16 %v806, %v799
    %v926 = vpack.c.b16 %v807, %v800
    %v927 = vpack.c.b16 %v808, %v801
    %v928 = vpack.c.b16 %v809, %v802
    %v929 = vpack.c.b16 %v810, %v803
    %v930 = vpack.c.b16 %v818, %v811
    %v931 = vpack.c.b16 %v819, %v812
    %v932 = vpack.c.b16 %v820, %v813
    %v933 = vpack.c.b16 %v821, %v814
    %v934 = vpack.c.b16 %v822, %v815
    %v935 = vpack.c.b16 %v823, %v816
    %v936 = vpack.c.b16 %v824, %v817
    %1049 = vmatprep.subr.bf16.mxu0 %v826
    %1050 = vmatpush1.bf16.msra.mxu0 %v825
    %1051 = vmatprep.subr.bf16.mxu0 %v833
    %1052 = vmatpush1.bf16.msra.mxu0 %v832
    %1053 = vmatprep.subr.bf16.mxu0 %v840
    %1054 = vmatpush1.bf16.msra.mxu0 %v839
    %1055 = vmatprep.subr.bf16.mxu0 %v847
    %1056 = vmatpush1.bf16.msra.mxu0 %v846
    %1057 = vmatprep.subr.bf16.mxu0 %v854
    %1058 = vmatpush1.bf16.msra.mxu0 %v853
    %1059 = vmatprep.subr.bf16.mxu0 %v861
    %1060 = vmatpush1.bf16.msra.mxu0 %v860
    %1061 = vmatprep.subr.bf16.mxu0 %v868
    %1062 = vmatpush1.bf16.msra.mxu0 %v867
    %1063 = vmatprep.subr.bf16.mxu0 %v875
    %1064 = vmatpush1.bf16.msra.mxu0 %v874
    %1065 = vmatprep.subr.bf16.mxu0 %v882
    %1066 = vmatpush1.bf16.msra.mxu0 %v881
    %1067 = vmatprep.subr.bf16.mxu0 %v889
    %1068 = vmatpush1.bf16.msra.mxu0 %v888
    %1069 = vmatprep.subr.bf16.mxu0 %v896
    %1070 = vmatpush1.bf16.msra.mxu0 %v895
    %1071 = vmatprep.subr.bf16.mxu0 %v903
    %1072 = vmatpush1.bf16.msra.mxu0 %v902
    %1073 = vmatprep.subr.bf16.mxu0 %v910
    %1074 = vmatpush1.bf16.msra.mxu0 %v909
    %1075 = vmatprep.subr.bf16.mxu0 %v917
    %1076 = vmatpush1.bf16.msra.mxu0 %v916
    %1077 = vmatprep.subr.bf16.mxu0 %v924
    %1078 = vmatpush1.bf16.msra.mxu0 %v923
    %1079 = vmatprep.subr.bf16.mxu0 %v931
    %1080 = vmatpush1.bf16.msra.mxu0 %v930
    %1081 = vmatprep.mubr.bf16.mxu0 %v307
    %1082 = vmatmul.mubr.bf16.gmra.mrb[0].mxu0 %v306
    %v1083 = vpop.f32.mrb[0].mxu0
    %v1084 = vadd.f32 %v441, %v1083
    %v1085 = vpop.f32.mrb[0].mxu0
    %v1086 = vadd.f32 %v445, %v1085
    %v1087 = vpop.f32.mrb[0].mxu0
    %v1088 = vadd.f32 %v441, %v1087
    %v1089 = vpop.f32.mrb[0].mxu0
    %v1090 = vadd.f32 %v445, %v1089
    %1091 = vdwg.mxu0
    %1092 = vmatprep.subr.bf16.mxu0 %v828
    %1093 = vmatpush1.bf16.msra.mxu0 %v827
    %1094 = vmatprep.subr.bf16.mxu0 %v835
    %1095 = vmatpush1.bf16.msra.mxu0 %v834
    %1096 = vmatprep.subr.bf16.mxu0 %v842
    %1097 = vmatpush1.bf16.msra.mxu0 %v841
    %1098 = vmatprep.subr.bf16.mxu0 %v849
    %1099 = vmatpush1.bf16.msra.mxu0 %v848
    %1100 = vmatprep.subr.bf16.mxu0 %v856
    %1101 = vmatpush1.bf16.msra.mxu0 %v855
    %1102 = vmatprep.subr.bf16.mxu0 %v863
    %1103 = vmatpush1.bf16.msra.mxu0 %v862
    %1104 = vmatprep.subr.bf16.mxu0 %v870
    %1105 = vmatpush1.bf16.msra.mxu0 %v869
    %1106 = vmatprep.subr.bf16.mxu0 %v877
    %1107 = vmatpush1.bf16.msra.mxu0 %v876
    %1108 = vmatprep.subr.bf16.mxu0 %v884
    %1109 = vmatpush1.bf16.msra.mxu0 %v883
    %1110 = vmatprep.subr.bf16.mxu0 %v891
    %1111 = vmatpush1.bf16.msra.mxu0 %v890
    %1112 = vmatprep.subr.bf16.mxu0 %v898
    %1113 = vmatpush1.bf16.msra.mxu0 %v897
    %1114 = vmatprep.subr.bf16.mxu0 %v905
    %1115 = vmatpush1.bf16.msra.mxu0 %v904
    %1116 = vmatprep.subr.bf16.mxu0 %v912
    %1117 = vmatpush1.bf16.msra.mxu0 %v911
    %1118 = vmatprep.subr.bf16.mxu0 %v919
    %1119 = vmatpush1.bf16.msra.mxu0 %v918
    %1120 = vmatprep.subr.bf16.mxu0 %v926
    %1121 = vmatpush1.bf16.msra.mxu0 %v925
    %1122 = vmatprep.subr.bf16.mxu0 %v933
    %1123 = vmatpush1.bf16.msra.mxu0 %v932
    %1124 = vmatprep.mubr.bf16.mxu0 %v307
    %1125 = vmatmul.mubr.bf16.gmra.mrb[0].mxu0 %v306
    %v1126 = vpop.f32.mrb[0].mxu0
    %v1127 = vadd.f32 %v449, %v1126
    %v1128 = vpop.f32.mrb[0].mxu0
    %v1129 = vadd.f32 %v453, %v1128
    %v1130 = vpop.f32.mrb[0].mxu0
    %v1131 = vadd.f32 %v449, %v1130
    %v1132 = vpop.f32.mrb[0].mxu0
    %v1133 = vadd.f32 %v453, %v1132
    %1134 = vdwg.mxu0
    %1135 = vmatprep.subr.bf16.mxu0 %v830
    %1136 = vmatpush1.bf16.msra.mxu0 %v829
    %1137 = vmatprep.subr.bf16.mxu0 %v837
    %1138 = vmatpush1.bf16.msra.mxu0 %v836
    %1139 = vmatprep.subr.bf16.mxu0 %v844
    %1140 = vmatpush1.bf16.msra.mxu0 %v843
    %1141 = vmatprep.subr.bf16.mxu0 %v851
    %1142 = vmatpush1.bf16.msra.mxu0 %v850
    %1143 = vmatprep.subr.bf16.mxu0 %v858
    %1144 = vmatpush1.bf16.msra.mxu0 %v857
    %1145 = vmatprep.subr.bf16.mxu0 %v865
    %1146 = vmatpush1.bf16.msra.mxu0 %v864
    %1147 = vmatprep.subr.bf16.mxu0 %v872
    %1148 = vmatpush1.bf16.msra.mxu0 %v871
    %1149 = vmatprep.subr.bf16.mxu0 %v879
    %1150 = vmatpush1.bf16.msra.mxu0 %v878
    %1151 = vmatprep.subr.bf16.mxu0 %v886
    %1152 = vmatpush1.bf16.msra.mxu0 %v885
    %1153 = vmatprep.subr.bf16.mxu0 %v893
    %1154 = vmatpush1.bf16.msra.mxu0 %v892
    %1155 = vmatprep.subr.bf16.mxu0 %v900
    %1156 = vmatpush1.bf16.msra.mxu0 %v899
    %1157 = vmatprep.subr.bf16.mxu0 %v907
    %1158 = vmatpush1.bf16.msra.mxu0 %v906
    %1159 = vmatprep.subr.bf16.mxu0 %v914
    %1160 = vmatpush1.bf16.msra.mxu0 %v913
    %1161 = vmatprep.subr.bf16.mxu0 %v921
    %1162 = vmatpush1.bf16.msra.mxu0 %v920
    %1163 = vmatprep.subr.bf16.mxu0 %v928
    %1164 = vmatpush1.bf16.msra.mxu0 %v927
    %1165 = vmatprep.subr.bf16.mxu0 %v935
    %1166 = vmatpush1.bf16.msra.mxu0 %v934
    %1167 = vmatprep.mubr.bf16.mxu0 %v307
    %1168 = vmatmul.mubr.bf16.gmra.mrb[0].mxu0 %v306
    %v1169 = vpop.f32.mrb[0].mxu0
    %v1170 = vadd.f32 %v457, %v1169
    %v1171 = vpop.f32.mrb[0].mxu0
    %v1172 = vadd.f32 %v461, %v1171
    %v1173 = vpop.f32.mrb[0].mxu0
    %v1174 = vadd.f32 %v457, %v1173
    %v1175 = vpop.f32.mrb[0].mxu0
    %v1176 = vadd.f32 %v461, %v1175
    %1177 = vdwg.mxu0
    %1178 = vmatprep.subr.bf16.mxu0 0
    %1179 = vmatpush1.bf16.msra.mxu0 %v831
    %1180 = vmatprep.subr.bf16.mxu0 0
    %1181 = vmatpush1.bf16.msra.mxu0 %v838
    %1182 = vmatprep.subr.bf16.mxu0 0
    %1183 = vmatpush1.bf16.msra.mxu0 %v845
    %1184 = vmatprep.subr.bf16.mxu0 0
    %1185 = vmatpush1.bf16.msra.mxu0 %v852
    %1186 = vmatprep.subr.bf16.mxu0 0
    %1187 = vmatpush1.bf16.msra.mxu0 %v859
    %1188 = vmatprep.subr.bf16.mxu0 0
    %1189 = vmatpush1.bf16.msra.mxu0 %v866
    %1190 = vmatprep.subr.bf16.mxu0 0
    %1191 = vmatpush1.bf16.msra.mxu0 %v873
    %1192 = vmatprep.subr.bf16.mxu0 0
    %1193 = vmatpush1.bf16.msra.mxu0 %v880
    %1194 = vmatprep.subr.bf16.mxu0 0
    %1195 = vmatpush1.bf16.msra.mxu0 %v887
    %1196 = vmatprep.subr.bf16.mxu0 0
    %1197 = vmatpush1.bf16.msra.mxu0 %v894
    %1198 = vmatprep.subr.bf16.mxu0 0
    %1199 = vmatpush1.bf16.msra.mxu0 %v901
    %1200 = vmatprep.subr.bf16.mxu0 0
    %1201 = vmatpush1.bf16.msra.mxu0 %v908
    %1202 = vmatprep.subr.bf16.mxu0 0
    %1203 = vmatpush1.bf16.msra.mxu0 %v915
    %1204 = vmatprep.subr.bf16.mxu0 0
    %1205 = vmatpush1.bf16.msra.mxu0 %v922
    %1206 = vmatprep.subr.bf16.mxu0 0
    %1207 = vmatpush1.bf16.msra.mxu0 %v929
    %1208 = vmatprep.subr.bf16.mxu0 0
    %1209 = vmatpush1.bf16.msra.mxu0 %v936
    %1210 = vmatprep.mubr.bf16.mxu0 %v307
    %1211 = vmatmul.mubr.bf16.gmra.mrb[0].mxu0 %v306
    %v1212 = vpop.f32.mrb[0].mxu0
    %v1213 = vadd.f32 %v465, %v1212
    %v1214 = vpop.f32.mrb[0].mxu0
    %v1215 = vpop.f32.mrb[0].mxu0
    %v1216 = vadd.f32 %v465, %v1215
    %v1217 = vpop.f32.mrb[0].mxu0
    %1218 = vdwg.mxu0
    %v1219 = vpack.c.bf16 %v1088, %v1084
    %v1220 = vpack.c.bf16 %v1090, %v1086
    %v1221 = vpack.c.bf16 %v1131, %v1127
    %v1222 = vpack.c.bf16 %v1133, %v1129
    %v1223 = vpack.c.bf16 %v1174, %v1170
    %v1224 = vpack.c.bf16 %v1176, %v1172
    %v1225 = vpack.c.bf16 %v1216, %v1213
    %v1226 = vtanh.bf16.pop %v1219
    %v1227 = vtanh.bf16.pop %v1220
    %v1228 = vtanh.bf16.pop %v1221
    %v1229 = vtanh.bf16.pop %v1222
    %v1230 = vtanh.bf16.pop %v1223
    %v1231 = vtanh.bf16.pop %v1224
    %v1232 = vtanh.bf16.pop %v1225
    %v1233 = vunpack.c.l.bf16 %v1226
    %v1234 = vunpack.c.l.bf16 %v1227
    %v1235 = vunpack.c.l.bf16 %v1228
    %v1236 = vunpack.c.l.bf16 %v1229
    %v1237 = vunpack.c.l.bf16 %v1230
    %v1238 = vunpack.c.l.bf16 %v1231
    %v1239 = vunpack.c.l.bf16 %v1232
    %v1240 = vunpack.c.h.bf16 %v1226
    %v1241 = vunpack.c.h.bf16 %v1227
    %v1242 = vunpack.c.h.bf16 %v1228
    %v1243 = vunpack.c.h.bf16 %v1229
    %v1244 = vunpack.c.h.bf16 %v1230
    %v1245 = vunpack.c.h.bf16 %v1231
    %v1246 = vunpack.c.h.bf16 %v1232
    %1247 = vst [vmem:[#allocation2] sm:$0xff] %v1233
    %1248 = vst [vmem:[#allocation2 + $0x8] sm:$0xff] %v1234
    %1249 = vst [vmem:[#allocation2 + $0x10] sm:$0xff] %v1235
    %1250 = vst [vmem:[#allocation2 + $0x18] sm:$0xff] %v1236
    %1251 = vst [vmem:[#allocation2 + $0x20] sm:$0xff] %v1237
    %1252 = vst [vmem:[#allocation2 + $0x28] sm:$0xff] %v1238
    %vm1253 = vcmask 130048
    %1254 = vst.msk [vmem:[#allocation2 + $0x30] sm:$0xff] %vm1253, %v1239
    %1255 = vst [vmem:[#allocation2 + $0x38] sm:$0xff] %v1240
    %1256 = vst [vmem:[#allocation2 + $0x40] sm:$0xff] %v1241
    %1257 = vst [vmem:[#allocation2 + $0x48] sm:$0xff] %v1242
    %1258 = vst [vmem:[#allocation2 + $0x50] sm:$0xff] %v1243
    %1259 = vst [vmem:[#allocation2 + $0x58] sm:$0xff] %v1244
    %1260 = vst [vmem:[#allocation2 + $0x60] sm:$0xff] %v1245
    %1261 = vst.msk [vmem:[#allocation2 + $0x68] sm:$0xff] %vm1253, %v1246
    // Predicated region
    $region30: #{tpu_custom_call.1} parent=1 // pred_check
      _
    $region31: #{tpu_custom_call.1} parent=1 // pred_check_branch
      %1263 = sbr.rel (0) target = $region33
    $region32: #{tpu_custom_call.1} parent=1 // pred_region
      %s1265 = ssub.s32 1792, 1792
      %1266 = vsyncadd [#allocation3], %s1265
      %s1267 = sshll.u32 [#allocation2], 4
      %s1268 = int_to_ptr.vmem [resolvable:$true] %s1267
      %1273 = dma.vmem_to_hbm [thread:$0]  %s1268, 1792, %s7, [#allocation3], 896, 896, 56
    $region33: #{tpu_custom_call.1} parent=1 // pred_fallthru
      _
    // Predicated region
    $region34: #{tpu_custom_call.1} parent=1 // pred_check
      _
    $region35: #{tpu_custom_call.1} parent=1 // pred_check_branch
      %1275 = sbr.rel (0) target = $region37
    $region36: #{tpu_custom_call.1} parent=1 // pred_region
      %1276 = dma.done [#allocation3], 1792
    $region37: #{tpu_custom_call.1} parent=1 // pred_fallthru
      _
    %1277 = vsyncpa [#allocation3], 1

</llo_original>
